<compile_context>
chip_gen: v7x
topology: tpu7x:2x2x1
jax: 0.10.0
libtpu: 0.0.40
codegen_flags: <defaults>
</compile_context>

<pallas_src>
import functools

import jax
import jax.numpy as jnp
from jax.experimental import pallas as pl
from jax.experimental.pallas import tpu as pltpu


def _cdiv(a, b):
    return -(-a // b)


def _round_up(x, m):
    return _cdiv(x, m) * m


def _ce_loss_grad_kernel(logits_ref, labels_ref, loss_ref, grad_ref, *, inv_n, batch):
    """One batch tile: per-tile CE partial sum + d(mean CE)/d(logits)."""
    i = pl.program_id(0)
    x = logits_ref[...].astype(jnp.float32)            # [TB, C]  (f32 accumulate)
    lbl = labels_ref[...]                               # [TB, 1]  int32
    tb, c = x.shape

    # numerically stable log-sum-exp
    m = jnp.max(x, axis=-1, keepdims=True)               # [TB, 1]
    e = jnp.exp(x - m)                                    # EUP
    s = jnp.sum(e, axis=-1, keepdims=True)                # XLU reduce
    lse = jnp.log(s) + m                                   # [TB, 1]

    # one-hot selection built in-kernel from int labels (no HBM one-hot input)
    onehot = jax.lax.broadcasted_iota(jnp.int32, (tb, c), 1) == lbl   # [TB, C] bool

    # per-row NLL: lse - x[label]; rows of the ragged last tile beyond B are masked
    picked = jnp.sum(jnp.where(onehot, x, 0.0), axis=-1, keepdims=True)
    row_valid = (i * tb + jax.lax.broadcasted_iota(jnp.int32, (tb, 1), 0)) < batch
    nll = jnp.where(row_valid, lse - picked, 0.0)

    # lane-dense per-tile partial sum (one small unmasked store instead of a
    # masked (tb, 1) vst.msk stream); the host sums num_tiles scalars.
    tile_partial = jnp.sum(nll) * inv_n
    loss_ref[...] = jnp.broadcast_to(tile_partial, loss_ref.shape).astype(jnp.float32)

    # d(mean CE)/d(logits) = (softmax(x) - onehot) / N.
    # Ragged rows land in the OOB-masked region of the partial output block,
    # so they are never written to HBM -> no extra masking needed here.
    p = e * pl.reciprocal(s, approx=True)                 # EUP reciprocal, frees VALU
    grad_ref[...] = (jnp.where(onehot, p - 1.0, p) * inv_n).astype(grad_ref.dtype)


def cross_entropy_with_grad(logits, labels, *, max_tb=1024, tb=None):
    """logits: [B, C] float; labels: [B] int.

    Returns (loss scalar f32, grad [B, C] in logits.dtype) — mean-reduction
    CrossEntropyLoss and its analytic gradient w.r.t. the logits.
    """
    B, C = logits.shape
    out_dtype = logits.dtype

    # ---- per-generation VMEM budget --------------------------------------
    try:
        vmem_cap = int(pltpu.get_tpu_info().vmem_capacity_bytes)
    except Exception:
        vmem_cap = 64 << 20                      # conservative: v7x per-TC physical
    vmem_limit = min((vmem_cap * 3) // 4, 96 << 20)   # headroom below physical
    budget = (vmem_limit * 4) // 5               # room for Mosaic-internal scratch

    # ---- batch tile sized by bytes, not a fixed constant ------------------
    if tb is None:
        in_b = jnp.dtype(logits.dtype).itemsize
        out_b = jnp.dtype(out_dtype).itemsize
        # double-buffered logits-in + grad-out tiles, plus ~5 tile-sized f32
        # temporaries created by the astype/exp/where chain.
        per_row = C * (2 * in_b + 2 * out_b + 5 * 4) + 16
        tb = budget // per_row
    tb = min(int(tb), max_tb, _round_up(B, 8))
    if B > 8:
        # keep at least 2 tiles so the "parallel" grid occupies both v7x TCs
        tb = min(tb, _round_up(_cdiv(B, 2), 8))
    tb = max(8, (tb // 8) * 8)
    num_tiles = _cdiv(B, tb)

    labels_2d = labels.reshape(B, 1).astype(jnp.int32)

    partials, grad = pl.pallas_call(
        functools.partial(_ce_loss_grad_kernel, inv_n=1.0 / B, batch=B),
        grid=(num_tiles,),
        in_specs=[
            pl.BlockSpec((tb, C), lambda i: (i, 0)),       # logits tile (ragged last tile OK)
            pl.BlockSpec((tb, 1), lambda i: (i, 0)),       # int32 labels tile
        ],
        out_specs=(
            pl.BlockSpec((1, 8, 128), lambda i: (i, 0, 0)),  # per-tile loss partial (lane-dense)
            pl.BlockSpec((tb, C), lambda i: (i, 0)),         # grad tile
        ),
        out_shape=(
            jax.ShapeDtypeStruct((num_tiles, 8, 128), jnp.float32),
            jax.ShapeDtypeStruct((B, C), out_dtype),
        ),
        compiler_params=pltpu.CompilerParams(
            dimension_semantics=("parallel",),   # tiles independent -> megacore-safe
            vmem_limit_bytes=int(vmem_limit),
        ),
    )(logits, labels_2d)

    loss = jnp.sum(partials[:, 0, 0])            # num_tiles scalars, already /B-scaled
    return loss, grad


def _reference(logits, labels):
    x = logits.astype(jnp.float32)
    logp = jax.nn.log_softmax(x, axis=-1)
    per = -jnp.take_along_axis(logp, labels[:, None].astype(jnp.int32), axis=-1)[:, 0]
    loss = jnp.mean(per)
    grad = (jax.nn.softmax(x, axis=-1)
            - jax.nn.one_hot(labels, logits.shape[-1], dtype=jnp.float32)) / logits.shape[0]
    return loss, grad.astype(logits.dtype)


if __name__ == "__main__":
    key = jax.random.PRNGKey(0)
    k1, k2, k3, k4, k5, k6 = jax.random.split(key, 6)

    # Case 1: small (N, C) matching the module's CrossEntropyLoss convention.
    B, C = 8, 32
    logits = jax.random.normal(k1, (B, C), dtype=jnp.float32)
    labels = jax.random.randint(k2, (B,), 0, C, dtype=jnp.int32)
    loss, grad = cross_entropy_with_grad(logits, labels)
    jax.block_until_ready((loss, grad))
    ref_loss, ref_grad = _reference(logits, labels)
    assert jnp.allclose(loss, ref_loss, atol=1e-5), (loss, ref_loss)
    assert jnp.allclose(grad, ref_grad, atol=5e-4)   # approx-reciprocal tolerance

    # Case 2: batch not divisible by the tile -> ragged last tile handled
    # in-kernel (no jnp.pad, no output slice), lane-dense C = 128.
    B2, C2 = 20, 128
    logits2 = jax.random.normal(k3, (B2, C2), dtype=jnp.float32)
    labels2 = jax.random.randint(k4, (B2,), 0, C2, dtype=jnp.int32)
    loss2, grad2 = cross_entropy_with_grad(logits2, labels2)
    jax.block_until_ready((loss2, grad2))
    ref_loss2, ref_grad2 = _reference(logits2, labels2)
    assert jnp.allclose(loss2, ref_loss2, atol=1e-5), (loss2, ref_loss2)
    assert jnp.allclose(grad2, ref_grad2, atol=5e-4)

    # Case 3: bf16 logits -> bf16 grad writeback (f32 math in-kernel).
    B3, C3 = 24, 256
    logits3 = jax.random.normal(k5, (B3, C3), dtype=jnp.bfloat16)
    labels3 = jax.random.randint(k6, (B3,), 0, C3, dtype=jnp.int32)
    loss3, grad3 = cross_entropy_with_grad(logits3, labels3)
    jax.block_until_ready((loss3, grad3))
    ref_loss3, ref_grad3 = _reference(logits3, labels3)
    assert jnp.allclose(loss3, ref_loss3, atol=1e-4), (loss3, ref_loss3)
    assert jnp.allclose(grad3.astype(jnp.float32), ref_grad3.astype(jnp.float32), atol=2e-3)

    print("KERNEL_OK")
</pallas_src>

<mosaic_0001>
module attributes {stable_mosaic.version = 11 : i64} {
  func.func @_ce_loss_grad_kernel(%arg0: i32, %arg1: memref<8x32xf32, #tpu.memory_space<vmem>>, %arg2: memref<8x1xi32, #tpu.memory_space<vmem>>, %arg3: memref<1x8x128xf32, #tpu.memory_space<vmem>>, %arg4: memref<8x32xf32, #tpu.memory_space<vmem>>) attributes {dimension_semantics = [#tpu.dimension_semantics<parallel>], iteration_bounds = array<i64: 1>, scalar_prefetch = 0 : i64, scratch_operands = 0 : i64, tpu.core_type = #tpu.core_type<tc>, window_params = [{transform_indices = @transform_0, window_bounds = array<i64: 8, 32>}, {transform_indices = @transform_1, window_bounds = array<i64: 8, 1>}, {transform_indices = @transform_2, window_bounds = array<i64: 1, 8, 128>}, {transform_indices = @transform_3, window_bounds = array<i64: 8, 32>}]} {
    %c0 = arith.constant 0 : index
    %c0_0 = arith.constant 0 : index
    %0 = vector.load %arg1[%c0, %c0_0] : memref<8x32xf32, #tpu.memory_space<vmem>>, vector<8x32xf32>
    %c0_1 = arith.constant 0 : index
    %c0_2 = arith.constant 0 : index
    %1 = vector.load %arg2[%c0_1, %c0_2] : memref<8x1xi32, #tpu.memory_space<vmem>>, vector<8x1xi32>
    %cst = arith.constant dense<0xFF800000> : vector<8xf32>
    %2 = vector.multi_reduction <maximumf>, %0, %cst [1] : vector<8x32xf32> to vector<8xf32>
    %3 = vector.shape_cast %2 : vector<8xf32> to vector<8x1xf32>
    %4 = vector.broadcast %3 : vector<8x1xf32> to vector<8x32xf32>
    %5 = arith.subf %0, %4 : vector<8x32xf32>
    %6 = math.exp %5 : vector<8x32xf32>
    %cst_3 = arith.constant dense<0.000000e+00> : vector<8xf32>
    %7 = vector.multi_reduction <add>, %6, %cst_3 [1] : vector<8x32xf32> to vector<8xf32>
    %8 = vector.shape_cast %7 : vector<8xf32> to vector<8x1xf32>
    %9 = math.log %8 : vector<8x1xf32>
    %10 = arith.addf %9, %3 : vector<8x1xf32>
    %11 = tpu.iota {dimensions = array<i32: 1>} : vector<8x32xi32>
    %12 = vector.broadcast %1 : vector<8x1xi32> to vector<8x32xi32>
    %13 = arith.cmpi eq, %11, %12 : vector<8x32xi32>
    %cst_4 = arith.constant 0.000000e+00 : f32
    %14 = vector.broadcast %cst_4 : f32 to vector<8x32xf32>
    %15 = arith.select %13, %0, %14 : vector<8x32xi1>, vector<8x32xf32>
    %cst_5 = arith.constant dense<0.000000e+00> : vector<8xf32>
    %16 = vector.multi_reduction <add>, %15, %cst_5 [1] : vector<8x32xf32> to vector<8xf32>
    %17 = vector.shape_cast %16 : vector<8xf32> to vector<8x1xf32>
    %c8_i32 = arith.constant 8 : i32
    %18 = arith.muli %arg0, %c8_i32 : i32
    %19 = tpu.iota {dimensions = array<i32: 0>} : vector<8x1xi32>
    %20 = vector.broadcast %18 : i32 to vector<8x1xi32>
    %21 = arith.addi %20, %19 : vector<8x1xi32>
    %c8_i32_6 = arith.constant 8 : i32
    %22 = vector.broadcast %c8_i32_6 : i32 to vector<8x1xi32>
    %23 = arith.cmpi slt, %21, %22 : vector<8x1xi32>
    %24 = arith.subf %10, %17 : vector<8x1xf32>
    %cst_7 = arith.constant 0.000000e+00 : f32
    %25 = vector.broadcast %cst_7 : f32 to vector<8x1xf32>
    %26 = arith.select %23, %24, %25 : vector<8x1xi1>, vector<8x1xf32>
    %27 = vector.shape_cast %26 : vector<8x1xf32> to vector<1x8x1xf32>
    %cst_8 = arith.constant dense<0.000000e+00> : vector<1xf32>
    %28 = vector.multi_reduction <add>, %27, %cst_8 [1, 2] : vector<1x8x1xf32> to vector<1xf32>
    %29 = vector.shape_cast %28 : vector<1xf32> to vector<1x1x1xf32>
    %30 = vector.extract %29[0, 0, 0] : f32 from vector<1x1x1xf32>
    %cst_9 = arith.constant 1.250000e-01 : f32
    %31 = arith.mulf %30, %cst_9 : f32
    %32 = vector.broadcast %31 : f32 to vector<1x8x128xf32>
    %c0_10 = arith.constant 0 : index
    %c0_11 = arith.constant 0 : index
    %c0_12 = arith.constant 0 : index
    %33 = vector.load %arg3[%c0_10, %c0_11, %c0_12] : memref<1x8x128xf32, #tpu.memory_space<vmem>>, vector<1x8x128xf32>
    tpu.vector_store %arg3[%c0_10, %c0_11, %c0_12], %32 {strides = array<i32>} : memref<1x8x128xf32, #tpu.memory_space<vmem>>, vector<1x8x128xf32>,
    %34 = tpu.reciprocal %8 {approx = true} : vector<8x1xf32> -> vector<8x1xf32>
    %35 = vector.broadcast %34 : vector<8x1xf32> to vector<8x32xf32>
    %36 = arith.mulf %6, %35 : vector<8x32xf32>
    %cst_13 = arith.constant 1.000000e+00 : f32
    %37 = vector.broadcast %cst_13 : f32 to vector<8x32xf32>
    %38 = arith.subf %36, %37 : vector<8x32xf32>
    %39 = arith.select %13, %38, %36 : vector<8x32xi1>, vector<8x32xf32>
    %cst_14 = arith.constant 1.250000e-01 : f32
    %40 = vector.broadcast %cst_14 : f32 to vector<8x32xf32>
    %41 = arith.mulf %39, %40 : vector<8x32xf32>
    %c0_15 = arith.constant 0 : index
    %c0_16 = arith.constant 0 : index
    %42 = vector.load %arg4[%c0_15, %c0_16] : memref<8x32xf32, #tpu.memory_space<vmem>>, vector<8x32xf32>
    tpu.vector_store %arg4[%c0_15, %c0_16], %41 {strides = array<i32>} : memref<8x32xf32, #tpu.memory_space<vmem>>, vector<8x32xf32>,
    return
  }
  func.func @transform_0(%arg0: i32) -> (i32, i32) {
    %c0_i32 = arith.constant 0 : i32
    %c0_i32_0 = arith.constant 0 : i32
    return %arg0, %c0_i32 : i32, i32
  }
  func.func @transform_1(%arg0: i32) -> (i32, i32) {
    %c0_i32 = arith.constant 0 : i32
    %c0_i32_0 = arith.constant 0 : i32
    return %arg0, %c0_i32 : i32, i32
  }
  func.func @transform_2(%arg0: i32) -> (i32, i32, i32) {
    %c0_i32 = arith.constant 0 : i32
    %c0_i32_0 = arith.constant 0 : i32
    %c0_i32_1 = arith.constant 0 : i32
    return %arg0, %c0_i32, %c0_i32_0 : i32, i32, i32
  }
  func.func @transform_3(%arg0: i32) -> (i32, i32) {
    %c0_i32 = arith.constant 0 : i32
    %c0_i32_0 = arith.constant 0 : i32
    return %arg0, %c0_i32 : i32, i32
  }
}

</mosaic_0001>

<llo_original>
// kernel: tpu_custom_call.1
$region0: #{tpu_custom_call.1}
  #allocation0 [shape = 'u32[]', space=smem, size = 0x4, offset = 0x4, fixed_abs, tag = 'smem constant byte address 0x4 - core index']
  #allocation1 [shape = 'u32[144,128]{1,0:T(1,128)}', space=vmem, size = 0x12000, scoped, tag = 'internal scratch']
  %s0 = inlined_call_operand.vmem [shape: f32[8,32], index: 0, kind: input, shape index: {}]
  %s1 = inlined_call_operand.vmem [shape: s32[8,1], index: 1, kind: input, shape index: {}]
  %s2 = inlined_call_operand.hbm [shape: f32[1,8,128], index: 2, kind: output, shape index: {0}]
  %s3 = inlined_call_operand.hbm [shape: f32[8,32], index: 3, kind: output, shape index: {1}]
  %4 = xla_tuple %s2, %s3
  %s5 = sld [smem:[#allocation0]]
  $region26: #{tpu_custom_call.1} parent=0
    _
  %s7 = ssub.s32 1, %s5
  %s8 = scalar_select 0, %s7, %s5
  $region1: #{tpu_custom_call.1} parent=0
    #allocation2 [shape = 'u8[4096]{0}', space=vmem, size = 0x1000, scoped, tag = 'output window, operand 0, single buffered']
    #allocation3 [shape = 's32[1]{0}', space=sflag, size = 0x4, scoped, tag = 'scoped memory for tpu_custom_call.1']
    #allocation4 [shape = 'u8[4096]{0}', space=vmem, size = 0x1000, scoped, tag = 'output window, operand 1, single buffered']
    #allocation5 [shape = 's32[1]{0}', space=sflag, size = 0x4, scoped, tag = 'scoped memory for tpu_custom_call.1']
    %9 = vsyncpa [#allocation3], 0
    %10 = vsyncpa [#allocation5], 0
    // Predicated region
    $region2: #{tpu_custom_call.1} parent=1 // pred_check
      _
    $region3: #{tpu_custom_call.1} parent=1 // pred_check_branch
      %12 = sbr.rel (0) target = $region5
    $region4: #{tpu_custom_call.1} parent=1 // pred_region
      _
    $region5: #{tpu_custom_call.1} parent=1 // pred_fallthru
      _
    // Predicated region
    $region6: #{tpu_custom_call.1} parent=1 // pred_check
      _
    $region7: #{tpu_custom_call.1} parent=1 // pred_check_branch
      %14 = sbr.rel (0) target = $region9
    $region8: #{tpu_custom_call.1} parent=1 // pred_region
      _
    $region9: #{tpu_custom_call.1} parent=1 // pred_fallthru
      _
    %v15 = vld [vmem:[%s0] sm:$0xff]
    %v16 = vld [vmem:[%s1] sm:$0xff]
    %vm17 = vcmask 261120
    %v18 = vsel %vm17, %v15, -inf
    %19 = vmax.xlane.f32.xlu0 %v18
    %v20 = vpop.xlane.xlu0 %19
    %v21 = vsub.f32 %v15, %v20
    %v22 = vmul.f32 %v21, 1.442695
    %v23 = vpow.pop %v22
    %v24 = vsel %vm17, %v23, 0.0
    %25 = vadd.xlane.f32.xlu0 %v24
    %v26 = vpop.xlane.xlu0 %25
    %v27 = vlog2.pop %v26
    %v28 = vmul.f32 %v27, 0.6931472
    %v29 = vadd.f32 %v28, %v20
    %v30 = vlaneseq
    %v31 = vand.u32 %v30, 127
    %32 = vset.pattern.permute.xlu0 0
    %33 = vperm.xlu0 %32, %v16
    %v34 = vpop.permute.xlu0 %33
    %vm35 = vcmp.eq.s32.totalorder %v31, %v34
    %v36 = vsel %vm35, %v15, 0.0
    %v37 = vsel %vm17, %v36, 0.0
    %38 = vadd.xlane.f32.xlu0 %v37
    %v39 = vpop.xlane.xlu0 %38
    %s40 = smul.u32 0, 8
    %v41 = vlaneseq
    %v42 = vshrl.u32 %v41, 7
    %v43 = vstv %s40
    %v44 = vadd.s32 %v43, %v42
    %vm45 = vcmp.lt.s32.totalorder %v44, 8
    %v46 = vsub.f32 %v29, %v39
    %v47 = vsel %vm45, %v46, 0.0
    %vm48 = vcmask 7168
    %v49 = vsel %vm48, %v47, 0.0
    %50 = vadd.xlane.f32.xlu0 %v49
    %v51 = vpop.xlane.xlu0 %50
    %v52 = vrot.slane %v51, 4
    %v53 = vadd.f32 %v51, %v52
    %v54 = vrot.slane %v53, 2
    %v55 = vadd.f32 %v53, %v54
    %v56 = vrot.slane %v55, 1
    %v57 = vadd.f32 %v55, %v56
    %s58 = vtos %v57
    %s59 = smul.f32 %s58, 0.125
    %v60 = vstv %s59
    %61 = vst [vmem:[#allocation2] sm:$0xff] %v60
    %v62 = vrcp.pop %v26
    %v63 = vmul.f32 %v23, %v62
    %v64 = vsub.f32 %v63, 1.0
    %v65 = vsel %vm35, %v64, %v63
    %v66 = vmul.f32 %v65, 0.125
    %67 = vst.msk [vmem:[#allocation4] sm:$0xff] %vm17, %v66
    // Predicated region
    $region10: #{tpu_custom_call.1} parent=1 // pred_check
      _
    $region11: #{tpu_custom_call.1} parent=1 // pred_check_branch
      %69 = sbr.rel (0) target = $region13
    $region12: #{tpu_custom_call.1} parent=1 // pred_region
      %s71 = ssub.s32 128, 128
      %72 = vsyncadd [#allocation3], %s71
      %s74 = sshll.u32 [#allocation2], 4
      %s75 = int_to_ptr.vmem [resolvable:$true] %s74
      %77 = dma.vmem_to_hbm [thread:$0]  %s75, 128, %s2, [#allocation3]
    $region13: #{tpu_custom_call.1} parent=1 // pred_fallthru
      _
    // Predicated region
    $region14: #{tpu_custom_call.1} parent=1 // pred_check
      _
    $region15: #{tpu_custom_call.1} parent=1 // pred_check_branch
      %79 = sbr.rel (0) target = $region17
    $region16: #{tpu_custom_call.1} parent=1 // pred_region
      %s81 = ssub.s32 128, 128
      %82 = vsyncadd [#allocation5], %s81
      %s84 = sshll.u32 [#allocation4], 4
      %s85 = int_to_ptr.vmem [resolvable:$true] %s84
      %87 = dma.vmem_to_hbm [thread:$0]  %s85, 128, %s3, [#allocation5]
    $region17: #{tpu_custom_call.1} parent=1 // pred_fallthru
      _
    // Predicated region
    $region18: #{tpu_custom_call.1} parent=1 // pred_check
      _
    $region19: #{tpu_custom_call.1} parent=1 // pred_check_branch
      %89 = sbr.rel (0) target = $region21
    $region20: #{tpu_custom_call.1} parent=1 // pred_region
      %90 = dma.done [#allocation3], 128
    $region21: #{tpu_custom_call.1} parent=1 // pred_fallthru
      _
    // Predicated region
    $region22: #{tpu_custom_call.1} parent=1 // pred_check
      _
    $region23: #{tpu_custom_call.1} parent=1 // pred_check_branch
      %92 = sbr.rel (0) target = $region25
    $region24: #{tpu_custom_call.1} parent=1 // pred_region
      %93 = dma.done [#allocation5], 128
    $region25: #{tpu_custom_call.1} parent=1 // pred_fallthru
      _
    %94 = vsyncpa [#allocation3], 1
    %95 = vsyncpa [#allocation5], 1

</llo_original>
